<compile_context>
chip_gen: v6e
topology: v6e:2x2x1
jax: 0.10.0
libtpu: 0.0.40
codegen_flags: <defaults>
</compile_context>

<pallas_src>
import math

import jax
import jax.numpy as jnp
from jax.experimental import pallas as pl
from jax.experimental.pallas import tpu as pltpu

_LANE = 128


def _identity_kernel(x_ref, o_ref):
    # Pure pass-through: copy the current VMEM tile unchanged.
    o_ref[...] = x_ref[...]


def _round_up(a, b):
    return (a + b - 1) // b * b


@jax.jit
def identity_pallas(x):
    """Pallas TPU implementation of Identity.forward: returns x unchanged."""
    orig_shape = x.shape
    orig_dtype = x.dtype
    total = math.prod(orig_shape) if orig_shape else 1

    if total == 0:
        # Nothing to copy; a kernel over an empty array is meaningless.
        return x

    itemsize = jnp.dtype(orig_dtype).itemsize
    # Sublane packing: 8 rows for 4-byte dtypes, 16 for 2-byte, 32 for 1-byte.
    pack = max(8, 32 // itemsize)

    # ---- lane-dense flattening ------------------------------------------
    # Last dim is a sizable multiple of 128 regardless of x.shape[-1].
    cols = 1024
    if total < cols * pack:
        # Small array: shrink cols (still a multiple of 128) to limit padding.
        cols = min(1024, max(_LANE, pl.next_power_of_2(pl.cdiv(total, pack))))
    rows = pl.cdiv(total, cols)

    # ---- byte-targeted tile size ----------------------------------------
    # ~1 MiB per block; never a whole-array fallback for large inputs.
    target_bytes = 1 << 20
    tile_rows = max(pack, (target_bytes // (cols * itemsize)) // pack * pack)
    tile_rows = min(tile_rows, _round_up(rows, pack))
    # Prefer >= 2 grid steps when the array is big enough, so the "parallel"
    # grid axis can be sharded across both TensorCores on v7x.
    if rows >= 2 * pack and tile_rows * 2 > _round_up(rows, pack):
        tile_rows = _round_up(pl.cdiv(rows, 2), pack)

    padded_rows = _round_up(rows, tile_rows)
    padded_total = padded_rows * cols

    flat = x.reshape(-1)
    if padded_total != total:
        flat = jnp.pad(flat, (0, padded_total - total))
    x2 = flat.reshape(padded_rows, cols)

    grid = (padded_rows // tile_rows,)

    out2 = pl.pallas_call(
        _identity_kernel,
        out_shape=jax.ShapeDtypeStruct((padded_rows, cols), orig_dtype),
        grid_spec=pltpu.PrefetchScalarGridSpec(
            num_scalar_prefetch=0,
            grid=grid,
            in_specs=[pl.BlockSpec((tile_rows, cols), lambda i: (i, 0))],
            out_specs=pl.BlockSpec((tile_rows, cols), lambda i: (i, 0)),
        ),
        compiler_params=pltpu.CompilerParams(
            dimension_semantics=("parallel",),
        ),
        # Output aliases the flattened/padded input buffer: no fresh HBM
        # allocation for the result of the copy.
        input_output_aliases={0: 0},
    )(x2)

    out_flat = out2.reshape(-1)
    if padded_total != total:
        out_flat = out_flat[:total]
    return out_flat.reshape(orig_shape)


if __name__ == "__main__":
    key = jax.random.PRNGKey(0)
    # Small NCHW observation tensor consistent with the module's usage.
    x = jax.random.normal(key, (2, 4, 16, 16), dtype=jnp.float32)

    y = identity_pallas(x)
    y = jax.block_until_ready(y)

    assert y.shape == x.shape, f"shape mismatch: {y.shape} vs {x.shape}"
    assert y.dtype == x.dtype, f"dtype mismatch: {y.dtype} vs {x.dtype}"
    assert bool(jnp.all(y == x)), "identity output differs from input"

    print("KERNEL_OK")
</pallas_src>

<mosaic_0001>
module attributes {stable_mosaic.version = 11 : i64} {
  func.func @_identity_kernel(%arg0: i32, %arg1: memref<8x256xf32, #tpu.memory_space<vmem>>, %arg2: memref<8x256xf32, #tpu.memory_space<vmem>>) attributes {dimension_semantics = [#tpu.dimension_semantics<parallel>], iteration_bounds = array<i64: 1>, scalar_prefetch = 0 : i64, scratch_operands = 0 : i64, tpu.core_type = #tpu.core_type<tc>, window_params = [{transform_indices = @transform_0, window_bounds = array<i64: 8, 256>}, {transform_indices = @transform_1, window_bounds = array<i64: 8, 256>}]} {
    %c0 = arith.constant 0 : index
    %c0_0 = arith.constant 0 : index
    %0 = vector.load %arg1[%c0, %c0_0] : memref<8x256xf32, #tpu.memory_space<vmem>>, vector<8x256xf32>
    %c0_1 = arith.constant 0 : index
    %c0_2 = arith.constant 0 : index
    %1 = vector.load %arg2[%c0_1, %c0_2] : memref<8x256xf32, #tpu.memory_space<vmem>>, vector<8x256xf32>
    tpu.vector_store %arg2[%c0_1, %c0_2], %0 {strides = array<i32>} : memref<8x256xf32, #tpu.memory_space<vmem>>, vector<8x256xf32>,
    return
  }
  func.func @transform_0(%arg0: i32) -> (i32, i32) {
    %c0_i32 = arith.constant 0 : i32
    %c0_i32_0 = arith.constant 0 : i32
    return %arg0, %c0_i32 : i32, i32
  }
  func.func @transform_1(%arg0: i32) -> (i32, i32) {
    %c0_i32 = arith.constant 0 : i32
    %c0_i32_0 = arith.constant 0 : i32
    return %arg0, %c0_i32 : i32, i32
  }
}

</mosaic_0001>

<llo_original>
// kernel: identity_pallas.1
$region0: #{identity_pallas.1}
  #allocation0 [shape = 'u32[]', space=smem, size = 0x4, offset = 0x4, fixed_abs, tag = 'smem constant byte address 0x4 - core index']
  #allocation1 [shape = 'u32[144,128]{1,0:T(1,128)}', space=vmem, size = 0x12000, scoped, tag = 'internal scratch']
  %s0 = inlined_call_operand.vmem [shape: f32[8,256], index: 0, kind: input, shape index: {}, may-alias: {0,1}]
  %s1 = inlined_call_operand.vmem [shape: f32[8,256], index: 1, kind: output, shape index: {}, may-alias: {0,1}]
  %s2 = sld [smem:[#allocation0]]
  $region14: #{identity_pallas.1} parent=0
    _
  %s4 = ssub.s32 1, %s2
  %s5 = scalar_select 0, %s4, %s2
  // Predicated region
  $region2: #{identity_pallas.1} parent=0 // pred_check
    _
  $region3: #{identity_pallas.1} parent=0 // pred_check_branch
    %7 = sbr.rel (0) target = $region5
  $region4: #{identity_pallas.1} parent=0 // pred_region
    _
  $region5: #{identity_pallas.1} parent=0 // pred_fallthru
    _
  %v8 = vld [vmem:[%s0] sm:$0xff]
  %v9 = vld [vmem:[%s0 + $0x8] sm:$0xff]
  %10 = vst [vmem:[%s1] sm:$0xff] %v8
  %11 = vst [vmem:[%s1 + $0x8] sm:$0xff] %v9
  // Predicated region
  $region6: #{identity_pallas.1} parent=0 // pred_check
    _
  $region7: #{identity_pallas.1} parent=0 // pred_check_branch
    %13 = sbr.rel (0) target = $region9
  $region8: #{identity_pallas.1} parent=0 // pred_region
    _
  $region9: #{identity_pallas.1} parent=0 // pred_fallthru
    _
  // Predicated region
  $region10: #{identity_pallas.1} parent=0 // pred_check
    _
  $region11: #{identity_pallas.1} parent=0 // pred_check_branch
    %15 = sbr.rel (0) target = $region13
  $region12: #{identity_pallas.1} parent=0 // pred_region
    _
  $region13: #{identity_pallas.1} parent=0 // pred_fallthru
    _

</llo_original>
